<compile_context>
chip_gen: v5e
topology: v5e:2x2
jax: 0.10.0
libtpu: 0.0.40
codegen_flags: <defaults>
</compile_context>

<pallas_src>
import jax
import jax.numpy as jnp
import numpy as np
from jax.experimental import pallas as pl
from jax.experimental.pallas import tpu as pltpu

# ---------------- problem sizes (small, consistent with the module) ---------
T = 8              # sequence length (t > 1 -> LSTM path is active)
O_DIM = 16         # obs_dim per step
S_DIM = 16         # state_dim == LSTM hidden size == LSTM fc output
G_DIM = 8          # goal_dim
A_DIM = 8          # action_dim
H1, H2 = 32, 32    # hidden_dim = [32, 32]
MAX_ACTION = 1.0
GATES = 4 * S_DIM  # 64 fused gate columns per direction (torch order i,f,g,o)

B_CHUNK = 8        # evaluations per grid step (full sublane tile)
OUT_LANES = 128    # lane-dense output block width

# ---------------- single weight slab layout (128 lanes, 8-aligned rows) -----
SLAB_W = 128
OFF_WXFB = 0       # (O_DIM, 128)  [wx_fwd | wx_bwd], g-gate cols pre-scaled 2x
OFF_B_FB = 16      # (1, 128)      [b_fwd  | b_bwd ], g-gate cols pre-scaled 2x
OFF_WH_F = 24      # (S_DIM, 64)   fwd hidden->gates, g-gate cols pre-scaled 2x
OFF_W1 = 40        # (40, H1)      vstack(fc_wf@l1_ws, fc_wb@l1_ws, l1_wg)
OFF_B1 = 80        # (1, H1)       fc_b@l1_ws + l1_b
OFF_L2_W = 88      # (H1, H2)
OFF_L2_B = 120     # (1, H2)
OFF_L3_W = 128     # (H2, A_DIM)
OFF_L3_B = 160     # (1, A_DIM)
SLAB_ROWS = 168    # 168 * 128 * 4B ~= 84 KB resident in VMEM


# ---------------------------- Pallas kernel --------------------------------
def actor_kernel(x_ref, g_ref, w_ref, out_ref):
    f32 = jnp.float32
    tb, _ = x_ref.shape                 # (T*Bc, O) time-major within the chunk
    bc = g_ref.shape[0]
    t = tb // bc

    # ---- loop-invariant weight views (static row slices of the slab) -------
    wxfb = w_ref[OFF_WXFB:OFF_WXFB + O_DIM, :]                    # (16, 128)
    b_fb = w_ref[OFF_B_FB:OFF_B_FB + 1, :]                        # (1, 128)
    wh_f = w_ref[OFF_WH_F:OFF_WH_F + S_DIM, :][:, 0:GATES]        # (16, 64)
    w1 = w_ref[OFF_W1:OFF_W1 + 2 * S_DIM + G_DIM, :][:, 0:H1]     # (40, 32)
    b1 = w_ref[OFF_B1:OFF_B1 + 1, :][:, 0:H1]
    w2 = w_ref[OFF_L2_W:OFF_L2_W + H1, :][:, 0:H2]
    b2 = w_ref[OFF_L2_B:OFF_L2_B + 1, :][:, 0:H2]
    w3 = w_ref[OFF_L3_W:OFF_L3_W + H2, :][:, 0:A_DIM]
    b3 = w_ref[OFF_L3_B:OFF_L3_B + 1, :][:, 0:A_DIM]

    # ---- ONE fused 128-lane input projection for BOTH directions -----------
    x2 = x_ref[...]                                               # (T*Bc, 16)
    xw = jnp.dot(x2, wxfb, preferred_element_type=f32) + b_fb     # (T*Bc, 128)

    # ---- forward recurrence, fully unrolled; 2 EUP pushes per step ---------
    # TODO(synk): hold wh_f in the MXU weight registers across the 8 steps via
    # pltpu.matmul_push_rhs / matmul_acc_lhs / matmul_pop once the raw-MXU
    # path is validated for these tiny (8x16)x(16x64) shapes.
    h = jnp.zeros((bc, S_DIM), f32)
    c = jnp.zeros((bc, S_DIM), f32)
    for step in range(t):
        z = (xw[step * bc:(step + 1) * bc, 0:GATES]
             + jnp.dot(h, wh_f, preferred_element_type=f32))      # (Bc, 64)
        s_all = jax.nn.sigmoid(z)                 # one EUP push over 64 lanes
        i_g = s_all[:, 0:S_DIM]
        f_g = s_all[:, S_DIM:2 * S_DIM]
        g_g = 2.0 * s_all[:, 2 * S_DIM:3 * S_DIM] - 1.0  # tanh via identity
        o_g = s_all[:, 3 * S_DIM:4 * S_DIM]
        c = f_g * c + i_g * g_g
        h = o_g * jnp.tanh(c)                     # second EUP push
    h_fwd = h

    # ---- backward direction: one cell step on x[:, T-1, :] from h0=c0=0 ----
    # pre-activations come for free from the fused projection (cols 64:128);
    # the h@Wh term and the forget gate vanish exactly.
    zb = xw[(t - 1) * bc:t * bc, GATES:2 * GATES]                 # (Bc, 64)
    sb = jax.nn.sigmoid(zb)
    ib = sb[:, 0:S_DIM]
    gb = 2.0 * sb[:, 2 * S_DIM:3 * S_DIM] - 1.0
    ob = sb[:, 3 * S_DIM:4 * S_DIM]
    h_bwd = ob * jnp.tanh(ib * gb)

    # ---- head: LSTM.fc folded into l1; concat realized on lanes; 3 pushes --
    feat = jnp.concatenate([h_fwd, h_bwd, g_ref[...]], axis=1)    # (Bc, 40)
    a1 = jnp.maximum(jnp.dot(feat, w1, preferred_element_type=f32) + b1, 0.0)
    a2 = jnp.maximum(jnp.dot(a1, w2, preferred_element_type=f32) + b2, 0.0)
    pre = jnp.dot(a2, w3, preferred_element_type=f32) + b3
    act = MAX_ACTION * jnp.tanh(pre)                              # (Bc, 8)

    # lane-dense (8,128) store; padding lanes sliced off in the wrapper
    out_ref[...] = jnp.concatenate(
        [act, jnp.zeros((bc, OUT_LANES - A_DIM), f32)], axis=1)


# ------------------------------- wrapper ------------------------------------
def worker_actor_forward(s, g, slab):
    """s: (batch, T, obs_dim) f32; g: (batch, goal_dim) f32; slab: packed weights.

    Returns action: (batch, action_dim) f32.
    """
    batch = s.shape[0]
    assert batch % B_CHUNK == 0, "batch must be a multiple of B_CHUNK"
    n = batch // B_CHUNK

    # layout plumbing outside the kernel: chunked, time-major inside a chunk
    x = s.reshape(n, B_CHUNK, T, O_DIM)
    x = jnp.transpose(x, (0, 2, 1, 3)).reshape(n, T * B_CHUNK, O_DIM)
    gg = g.reshape(n, B_CHUNK, G_DIM)

    out = pl.pallas_call(
        actor_kernel,
        grid=(n,),
        out_shape=jax.ShapeDtypeStruct((n, B_CHUNK, OUT_LANES), jnp.float32),
        in_specs=[
            pl.BlockSpec((None, T * B_CHUNK, O_DIM), lambda i: (i, 0, 0)),
            pl.BlockSpec((None, B_CHUNK, G_DIM), lambda i: (i, 0, 0)),
            # constant index_map -> slab DMA'd once, resident across the grid
            pl.BlockSpec((SLAB_ROWS, SLAB_W), lambda i: (0, 0)),
        ],
        out_specs=pl.BlockSpec((None, B_CHUNK, OUT_LANES), lambda i: (i, 0, 0)),
        compiler_params=pltpu.CompilerParams(
            dimension_semantics=("parallel",)),
    )(x, gg, slab)
    return out[:, :, :A_DIM].reshape(batch, A_DIM)


# ------------------------- param init & packing ------------------------------
def init_params(key):
    shapes = {
        "wx_f": (O_DIM, GATES), "wh_f": (S_DIM, GATES), "b_f": (1, GATES),
        "wx_b": (O_DIM, GATES), "wh_b": (S_DIM, GATES), "b_b": (1, GATES),
        "fc_wf": (S_DIM, S_DIM), "fc_wb": (S_DIM, S_DIM), "fc_b": (1, S_DIM),
        "l1_ws": (S_DIM, H1), "l1_wg": (G_DIM, H1), "l1_b": (1, H1),
        "l2_w": (H1, H2), "l2_b": (1, H2),
        "l3_w": (H2, A_DIM), "l3_b": (1, A_DIM),
    }
    names = sorted(shapes)
    keys = jax.random.split(key, len(names))
    return {n: (0.1 * jax.random.normal(k, shapes[n])).astype(jnp.float32)
            for n, k in zip(names, keys)}


def pack_params(p):
    """Pack all weights/biases into one zero-padded (SLAB_ROWS, 128) f32 slab."""
    slab = np.zeros((SLAB_ROWS, SLAB_W), np.float32)

    def scale_g(a):
        # pre-scale g-gate columns (torch gate order i,f,g,o) by 2 so the
        # kernel can use tanh(x) = 2*sigmoid(2x) - 1 with a single sigmoid.
        a = np.array(a, np.float32, copy=True)
        a[:, 2 * S_DIM:3 * S_DIM] *= 2.0
        return a

    def put(r, c, arr):
        a = np.asarray(arr, np.float32)
        slab[r:r + a.shape[0], c:c + a.shape[1]] = a

    put(OFF_WXFB, 0, scale_g(p["wx_f"]))
    put(OFF_WXFB, GATES, scale_g(p["wx_b"]))
    put(OFF_B_FB, 0, scale_g(p["b_f"]))
    put(OFF_B_FB, GATES, scale_g(p["b_b"]))
    put(OFF_WH_F, 0, scale_g(p["wh_f"]))
    # wh_b deliberately not packed: the backward half of r_out[:, -1, :] is a
    # single cell step from h0 = 0, so h0 @ wh_b == 0 exactly.

    # LSTM.fc folded into l1 at pack time (no nonlinearity between them).
    w_fs = np.asarray(p["fc_wf"], np.float32) @ np.asarray(p["l1_ws"], np.float32)
    w_bs = np.asarray(p["fc_wb"], np.float32) @ np.asarray(p["l1_ws"], np.float32)
    b1 = (np.asarray(p["fc_b"], np.float32) @ np.asarray(p["l1_ws"], np.float32)
          + np.asarray(p["l1_b"], np.float32))
    put(OFF_W1, 0, np.concatenate(
        [w_fs, w_bs, np.asarray(p["l1_wg"], np.float32)], axis=0))
    put(OFF_B1, 0, b1)

    put(OFF_L2_W, 0, p["l2_w"]); put(OFF_L2_B, 0, p["l2_b"])
    put(OFF_L3_W, 0, p["l3_w"]); put(OFF_L3_B, 0, p["l3_b"])
    return jnp.asarray(slab)


# ------------------------- pure-JAX reference --------------------------------
def ref_forward(s, g, p):
    batch, t_steps, _ = s.shape

    def cell(xt, h, c, wx, wh, b):
        z = xt @ wx + h @ wh + b                    # (B, 4H), gate order i,f,g,o
        i = jax.nn.sigmoid(z[:, 0:S_DIM])
        f = jax.nn.sigmoid(z[:, S_DIM:2 * S_DIM])
        gg = jnp.tanh(z[:, 2 * S_DIM:3 * S_DIM])
        o = jax.nn.sigmoid(z[:, 3 * S_DIM:4 * S_DIM])
        c = f * c + i * gg
        h = o * jnp.tanh(c)
        return h, c

    h = jnp.zeros((batch, S_DIM)); c = jnp.zeros((batch, S_DIM))
    for t in range(t_steps):
        h, c = cell(s[:, t], h, c, p["wx_f"], p["wh_f"], p["b_f"])
    h_fwd = h

    # Full reverse pass (validates the kernel's single-step simplification).
    h = jnp.zeros((batch, S_DIM)); c = jnp.zeros((batch, S_DIM))
    outs = [None] * t_steps
    for t in reversed(range(t_steps)):
        h, c = cell(s[:, t], h, c, p["wx_b"], p["wh_b"], p["b_b"])
        outs[t] = h
    h_bwd = outs[t_steps - 1]

    st = h_fwd @ p["fc_wf"] + h_bwd @ p["fc_wb"] + p["fc_b"]
    x = jnp.maximum(st @ p["l1_ws"] + g @ p["l1_wg"] + p["l1_b"], 0.0)
    x = jnp.maximum(x @ p["l2_w"] + p["l2_b"], 0.0)
    return MAX_ACTION * jnp.tanh(x @ p["l3_w"] + p["l3_b"])


if __name__ == "__main__":
    root = jax.random.PRNGKey(0)
    k_s, k_g, k_p = jax.random.split(root, 3)

    BATCH = 32                       # 4 grid chunks of 8 evaluations each
    s = jax.random.normal(k_s, (BATCH, T, O_DIM), dtype=jnp.float32)
    g = jax.random.normal(k_g, (BATCH, G_DIM), dtype=jnp.float32)
    params = init_params(k_p)
    slab = pack_params(params)

    act = worker_actor_forward(s, g, slab)
    act = jax.block_until_ready(act)

    ref = ref_forward(s, g, params)
    np.testing.assert_allclose(np.asarray(act), np.asarray(ref),
                               rtol=1e-5, atol=2e-5)

    print("KERNEL_OK")
</pallas_src>

<mosaic_0001>
module attributes {stable_mosaic.version = 11 : i64} {
  func.func @actor_kernel(%arg0: i32, %arg1: memref<1x64x16xf32, #tpu.memory_space<vmem>>, %arg2: memref<1x8x8xf32, #tpu.memory_space<vmem>>, %arg3: memref<168x128xf32, #tpu.memory_space<vmem>>, %arg4: memref<1x8x128xf32, #tpu.memory_space<vmem>>) attributes {dimension_semantics = [#tpu.dimension_semantics<parallel>], iteration_bounds = array<i64: 4>, scalar_prefetch = 0 : i64, scratch_operands = 0 : i64, tpu.core_type = #tpu.core_type<tc>, window_params = [{transform_indices = @transform_0, window_bounds = array<i64: 1, 64, 16>}, {transform_indices = @transform_1, window_bounds = array<i64: 1, 8, 8>}, {pipeline_mode = #tpu.pipeline_mode<synchronous>, transform_indices = @transform_2, window_bounds = array<i64: 168, 128>}, {transform_indices = @transform_3, window_bounds = array<i64: 1, 8, 128>}]} {
    %c0 = arith.constant 0 : index
    %c0_0 = arith.constant 0 : index
    %0 = vector.load %arg3[%c0, %c0_0] : memref<168x128xf32, #tpu.memory_space<vmem>>, vector<16x128xf32>
    %c16 = arith.constant 16 : index
    %c0_1 = arith.constant 0 : index
    %1 = vector.load %arg3[%c16, %c0_1] : memref<168x128xf32, #tpu.memory_space<vmem>>, vector<1x128xf32>
    %c24 = arith.constant 24 : index
    %c0_2 = arith.constant 0 : index
    %2 = vector.load %arg3[%c24, %c0_2] : memref<168x128xf32, #tpu.memory_space<vmem>>, vector<16x128xf32>
    %3 = vector.extract_strided_slice %2 {offsets = [0, 0], sizes = [16, 64], strides = [1, 1]} : vector<16x128xf32> to vector<16x64xf32>
    %c40 = arith.constant 40 : index
    %c0_3 = arith.constant 0 : index
    %4 = vector.load %arg3[%c40, %c0_3] : memref<168x128xf32, #tpu.memory_space<vmem>>, vector<40x128xf32>
    %5 = vector.extract_strided_slice %4 {offsets = [0, 0], sizes = [40, 32], strides = [1, 1]} : vector<40x128xf32> to vector<40x32xf32>
    %c80 = arith.constant 80 : index
    %c0_4 = arith.constant 0 : index
    %6 = vector.load %arg3[%c80, %c0_4] : memref<168x128xf32, #tpu.memory_space<vmem>>, vector<1x128xf32>
    %7 = vector.extract_strided_slice %6 {offsets = [0, 0], sizes = [1, 32], strides = [1, 1]} : vector<1x128xf32> to vector<1x32xf32>
    %c88 = arith.constant 88 : index
    %c0_5 = arith.constant 0 : index
    %8 = vector.load %arg3[%c88, %c0_5] : memref<168x128xf32, #tpu.memory_space<vmem>>, vector<32x128xf32>
    %9 = vector.extract_strided_slice %8 {offsets = [0, 0], sizes = [32, 32], strides = [1, 1]} : vector<32x128xf32> to vector<32x32xf32>
    %c120 = arith.constant 120 : index
    %c0_6 = arith.constant 0 : index
    %10 = vector.load %arg3[%c120, %c0_6] : memref<168x128xf32, #tpu.memory_space<vmem>>, vector<1x128xf32>
    %11 = vector.extract_strided_slice %10 {offsets = [0, 0], sizes = [1, 32], strides = [1, 1]} : vector<1x128xf32> to vector<1x32xf32>
    %c128 = arith.constant 128 : index
    %c0_7 = arith.constant 0 : index
    %12 = vector.load %arg3[%c128, %c0_7] : memref<168x128xf32, #tpu.memory_space<vmem>>, vector<32x128xf32>
    %13 = vector.extract_strided_slice %12 {offsets = [0, 0], sizes = [32, 8], strides = [1, 1]} : vector<32x128xf32> to vector<32x8xf32>
    %c160 = arith.constant 160 : index
    %c0_8 = arith.constant 0 : index
    %14 = vector.load %arg3[%c160, %c0_8] : memref<168x128xf32, #tpu.memory_space<vmem>>, vector<1x128xf32>
    %15 = vector.extract_strided_slice %14 {offsets = [0, 0], sizes = [1, 8], strides = [1, 1]} : vector<1x128xf32> to vector<1x8xf32>
    %c0_9 = arith.constant 0 : index
    %c0_10 = arith.constant 0 : index
    %c0_11 = arith.constant 0 : index
    %16 = vector.load %arg1[%c0_9, %c0_10, %c0_11] : memref<1x64x16xf32, #tpu.memory_space<vmem>>, vector<1x64x16xf32>
    %17 = vector.shape_cast %16 : vector<1x64x16xf32> to vector<64x16xf32>
    %cst = arith.constant dense<0.000000e+00> : vector<64x128xf32>
    %18 = tpu.matmul %17, %0, %cst {dimension_numbers = #tpu.dot_dimension_numbers<[1], [0], [0], [1], [0, 0, 1, 1], [], []>} : vector<64x16xf32>, vector<16x128xf32>, vector<64x128xf32> -> vector<64x128xf32>
    %19 = vector.broadcast %1 : vector<1x128xf32> to vector<64x128xf32>
    %20 = arith.addf %18, %19 : vector<64x128xf32>
    %cst_12 = arith.constant 0.000000e+00 : f32
    %21 = vector.broadcast %cst_12 : f32 to vector<8x16xf32>
    %cst_13 = arith.constant 0.000000e+00 : f32
    %22 = vector.broadcast %cst_13 : f32 to vector<8x16xf32>
    %23 = vector.extract_strided_slice %20 {offsets = [0, 0], sizes = [8, 64], strides = [1, 1]} : vector<64x128xf32> to vector<8x64xf32>
    %cst_14 = arith.constant dense<0.000000e+00> : vector<8x64xf32>
    %24 = tpu.matmul %21, %3, %cst_14 {dimension_numbers = #tpu.dot_dimension_numbers<[1], [0], [0], [1], [0, 0, 1, 1], [], []>} : vector<8x16xf32>, vector<16x64xf32>, vector<8x64xf32> -> vector<8x64xf32>
    %25 = arith.addf %23, %24 : vector<8x64xf32>
    %26 = arith.negf %25 : vector<8x64xf32>
    %27 = math.exp %26 : vector<8x64xf32>
    %cst_15 = arith.constant 1.000000e+00 : f32
    %28 = vector.broadcast %cst_15 : f32 to vector<8x64xf32>
    %29 = arith.addf %28, %27 : vector<8x64xf32>
    %30 = arith.divf %28, %29 : vector<8x64xf32>
    %31 = vector.extract_strided_slice %30 {offsets = [0, 0], sizes = [8, 16], strides = [1, 1]} : vector<8x64xf32> to vector<8x16xf32>
    %32 = vector.extract_strided_slice %30 {offsets = [0, 16], sizes = [8, 16], strides = [1, 1]} : vector<8x64xf32> to vector<8x16xf32>
    %33 = vector.extract_strided_slice %30 {offsets = [0, 32], sizes = [8, 16], strides = [1, 1]} : vector<8x64xf32> to vector<8x16xf32>
    %cst_16 = arith.constant 2.000000e+00 : f32
    %34 = vector.broadcast %cst_16 : f32 to vector<8x16xf32>
    %35 = arith.mulf %34, %33 : vector<8x16xf32>
    %cst_17 = arith.constant 1.000000e+00 : f32
    %36 = vector.broadcast %cst_17 : f32 to vector<8x16xf32>
    %37 = arith.subf %35, %36 : vector<8x16xf32>
    %38 = vector.extract_strided_slice %30 {offsets = [0, 48], sizes = [8, 16], strides = [1, 1]} : vector<8x64xf32> to vector<8x16xf32>
    %39 = arith.mulf %32, %22 : vector<8x16xf32>
    %40 = arith.mulf %31, %37 : vector<8x16xf32>
    %41 = arith.addf %39, %40 : vector<8x16xf32>
    %42 = math.tanh %41 : vector<8x16xf32>
    %43 = arith.mulf %38, %42 : vector<8x16xf32>
    %44 = vector.extract_strided_slice %20 {offsets = [8, 0], sizes = [8, 64], strides = [1, 1]} : vector<64x128xf32> to vector<8x64xf32>
    %cst_18 = arith.constant dense<0.000000e+00> : vector<8x64xf32>
    %45 = tpu.matmul %43, %3, %cst_18 {dimension_numbers = #tpu.dot_dimension_numbers<[1], [0], [0], [1], [0, 0, 1, 1], [], []>} : vector<8x16xf32>, vector<16x64xf32>, vector<8x64xf32> -> vector<8x64xf32>
    %46 = arith.addf %44, %45 : vector<8x64xf32>
    %47 = arith.negf %46 : vector<8x64xf32>
    %48 = math.exp %47 : vector<8x64xf32>
    %cst_19 = arith.constant 1.000000e+00 : f32
    %49 = vector.broadcast %cst_19 : f32 to vector<8x64xf32>
    %50 = arith.addf %49, %48 : vector<8x64xf32>
    %51 = arith.divf %49, %50 : vector<8x64xf32>
    %52 = vector.extract_strided_slice %51 {offsets = [0, 0], sizes = [8, 16], strides = [1, 1]} : vector<8x64xf32> to vector<8x16xf32>
    %53 = vector.extract_strided_slice %51 {offsets = [0, 16], sizes = [8, 16], strides = [1, 1]} : vector<8x64xf32> to vector<8x16xf32>
    %54 = vector.extract_strided_slice %51 {offsets = [0, 32], sizes = [8, 16], strides = [1, 1]} : vector<8x64xf32> to vector<8x16xf32>
    %cst_20 = arith.constant 2.000000e+00 : f32
    %55 = vector.broadcast %cst_20 : f32 to vector<8x16xf32>
    %56 = arith.mulf %55, %54 : vector<8x16xf32>
    %cst_21 = arith.constant 1.000000e+00 : f32
    %57 = vector.broadcast %cst_21 : f32 to vector<8x16xf32>
    %58 = arith.subf %56, %57 : vector<8x16xf32>
    %59 = vector.extract_strided_slice %51 {offsets = [0, 48], sizes = [8, 16], strides = [1, 1]} : vector<8x64xf32> to vector<8x16xf32>
    %60 = arith.mulf %53, %41 : vector<8x16xf32>
    %61 = arith.mulf %52, %58 : vector<8x16xf32>
    %62 = arith.addf %60, %61 : vector<8x16xf32>
    %63 = math.tanh %62 : vector<8x16xf32>
    %64 = arith.mulf %59, %63 : vector<8x16xf32>
    %65 = vector.extract_strided_slice %20 {offsets = [16, 0], sizes = [8, 64], strides = [1, 1]} : vector<64x128xf32> to vector<8x64xf32>
    %cst_22 = arith.constant dense<0.000000e+00> : vector<8x64xf32>
    %66 = tpu.matmul %64, %3, %cst_22 {dimension_numbers = #tpu.dot_dimension_numbers<[1], [0], [0], [1], [0, 0, 1, 1], [], []>} : vector<8x16xf32>, vector<16x64xf32>, vector<8x64xf32> -> vector<8x64xf32>
    %67 = arith.addf %65, %66 : vector<8x64xf32>
    %68 = arith.negf %67 : vector<8x64xf32>
    %69 = math.exp %68 : vector<8x64xf32>
    %cst_23 = arith.constant 1.000000e+00 : f32
    %70 = vector.broadcast %cst_23 : f32 to vector<8x64xf32>
    %71 = arith.addf %70, %69 : vector<8x64xf32>
    %72 = arith.divf %70, %71 : vector<8x64xf32>
    %73 = vector.extract_strided_slice %72 {offsets = [0, 0], sizes = [8, 16], strides = [1, 1]} : vector<8x64xf32> to vector<8x16xf32>
    %74 = vector.extract_strided_slice %72 {offsets = [0, 16], sizes = [8, 16], strides = [1, 1]} : vector<8x64xf32> to vector<8x16xf32>
    %75 = vector.extract_strided_slice %72 {offsets = [0, 32], sizes = [8, 16], strides = [1, 1]} : vector<8x64xf32> to vector<8x16xf32>
    %cst_24 = arith.constant 2.000000e+00 : f32
    %76 = vector.broadcast %cst_24 : f32 to vector<8x16xf32>
    %77 = arith.mulf %76, %75 : vector<8x16xf32>
    %cst_25 = arith.constant 1.000000e+00 : f32
    %78 = vector.broadcast %cst_25 : f32 to vector<8x16xf32>
    %79 = arith.subf %77, %78 : vector<8x16xf32>
    %80 = vector.extract_strided_slice %72 {offsets = [0, 48], sizes = [8, 16], strides = [1, 1]} : vector<8x64xf32> to vector<8x16xf32>
    %81 = arith.mulf %74, %62 : vector<8x16xf32>
    %82 = arith.mulf %73, %79 : vector<8x16xf32>
    %83 = arith.addf %81, %82 : vector<8x16xf32>
    %84 = math.tanh %83 : vector<8x16xf32>
    %85 = arith.mulf %80, %84 : vector<8x16xf32>
    %86 = vector.extract_strided_slice %20 {offsets = [24, 0], sizes = [8, 64], strides = [1, 1]} : vector<64x128xf32> to vector<8x64xf32>
    %cst_26 = arith.constant dense<0.000000e+00> : vector<8x64xf32>
    %87 = tpu.matmul %85, %3, %cst_26 {dimension_numbers = #tpu.dot_dimension_numbers<[1], [0], [0], [1], [0, 0, 1, 1], [], []>} : vector<8x16xf32>, vector<16x64xf32>, vector<8x64xf32> -> vector<8x64xf32>
    %88 = arith.addf %86, %87 : vector<8x64xf32>
    %89 = arith.negf %88 : vector<8x64xf32>
    %90 = math.exp %89 : vector<8x64xf32>
    %cst_27 = arith.constant 1.000000e+00 : f32
    %91 = vector.broadcast %cst_27 : f32 to vector<8x64xf32>
    %92 = arith.addf %91, %90 : vector<8x64xf32>
    %93 = arith.divf %91, %92 : vector<8x64xf32>
    %94 = vector.extract_strided_slice %93 {offsets = [0, 0], sizes = [8, 16], strides = [1, 1]} : vector<8x64xf32> to vector<8x16xf32>
    %95 = vector.extract_strided_slice %93 {offsets = [0, 16], sizes = [8, 16], strides = [1, 1]} : vector<8x64xf32> to vector<8x16xf32>
    %96 = vector.extract_strided_slice %93 {offsets = [0, 32], sizes = [8, 16], strides = [1, 1]} : vector<8x64xf32> to vector<8x16xf32>
    %cst_28 = arith.constant 2.000000e+00 : f32
    %97 = vector.broadcast %cst_28 : f32 to vector<8x16xf32>
    %98 = arith.mulf %97, %96 : vector<8x16xf32>
    %cst_29 = arith.constant 1.000000e+00 : f32
    %99 = vector.broadcast %cst_29 : f32 to vector<8x16xf32>
    %100 = arith.subf %98, %99 : vector<8x16xf32>
    %101 = vector.extract_strided_slice %93 {offsets = [0, 48], sizes = [8, 16], strides = [1, 1]} : vector<8x64xf32> to vector<8x16xf32>
    %102 = arith.mulf %95, %83 : vector<8x16xf32>
    %103 = arith.mulf %94, %100 : vector<8x16xf32>
    %104 = arith.addf %102, %103 : vector<8x16xf32>
    %105 = math.tanh %104 : vector<8x16xf32>
    %106 = arith.mulf %101, %105 : vector<8x16xf32>
    %107 = vector.extract_strided_slice %20 {offsets = [32, 0], sizes = [8, 64], strides = [1, 1]} : vector<64x128xf32> to vector<8x64xf32>
    %cst_30 = arith.constant dense<0.000000e+00> : vector<8x64xf32>
    %108 = tpu.matmul %106, %3, %cst_30 {dimension_numbers = #tpu.dot_dimension_numbers<[1], [0], [0], [1], [0, 0, 1, 1], [], []>} : vector<8x16xf32>, vector<16x64xf32>, vector<8x64xf32> -> vector<8x64xf32>
    %109 = arith.addf %107, %108 : vector<8x64xf32>
    %110 = arith.negf %109 : vector<8x64xf32>
    %111 = math.exp %110 : vector<8x64xf32>
    %cst_31 = arith.constant 1.000000e+00 : f32
    %112 = vector.broadcast %cst_31 : f32 to vector<8x64xf32>
    %113 = arith.addf %112, %111 : vector<8x64xf32>
    %114 = arith.divf %112, %113 : vector<8x64xf32>
    %115 = vector.extract_strided_slice %114 {offsets = [0, 0], sizes = [8, 16], strides = [1, 1]} : vector<8x64xf32> to vector<8x16xf32>
    %116 = vector.extract_strided_slice %114 {offsets = [0, 16], sizes = [8, 16], strides = [1, 1]} : vector<8x64xf32> to vector<8x16xf32>
    %117 = vector.extract_strided_slice %114 {offsets = [0, 32], sizes = [8, 16], strides = [1, 1]} : vector<8x64xf32> to vector<8x16xf32>
    %cst_32 = arith.constant 2.000000e+00 : f32
    %118 = vector.broadcast %cst_32 : f32 to vector<8x16xf32>
    %119 = arith.mulf %118, %117 : vector<8x16xf32>
    %cst_33 = arith.constant 1.000000e+00 : f32
    %120 = vector.broadcast %cst_33 : f32 to vector<8x16xf32>
    %121 = arith.subf %119, %120 : vector<8x16xf32>
    %122 = vector.extract_strided_slice %114 {offsets = [0, 48], sizes = [8, 16], strides = [1, 1]} : vector<8x64xf32> to vector<8x16xf32>
    %123 = arith.mulf %116, %104 : vector<8x16xf32>
    %124 = arith.mulf %115, %121 : vector<8x16xf32>
    %125 = arith.addf %123, %124 : vector<8x16xf32>
    %126 = math.tanh %125 : vector<8x16xf32>
    %127 = arith.mulf %122, %126 : vector<8x16xf32>
    %128 = vector.extract_strided_slice %20 {offsets = [40, 0], sizes = [8, 64], strides = [1, 1]} : vector<64x128xf32> to vector<8x64xf32>
    %cst_34 = arith.constant dense<0.000000e+00> : vector<8x64xf32>
    %129 = tpu.matmul %127, %3, %cst_34 {dimension_numbers = #tpu.dot_dimension_numbers<[1], [0], [0], [1], [0, 0, 1, 1], [], []>} : vector<8x16xf32>, vector<16x64xf32>, vector<8x64xf32> -> vector<8x64xf32>
    %130 = arith.addf %128, %129 : vector<8x64xf32>
    %131 = arith.negf %130 : vector<8x64xf32>
    %132 = math.exp %131 : vector<8x64xf32>
    %cst_35 = arith.constant 1.000000e+00 : f32
    %133 = vector.broadcast %cst_35 : f32 to vector<8x64xf32>
    %134 = arith.addf %133, %132 : vector<8x64xf32>
    %135 = arith.divf %133, %134 : vector<8x64xf32>
    %136 = vector.extract_strided_slice %135 {offsets = [0, 0], sizes = [8, 16], strides = [1, 1]} : vector<8x64xf32> to vector<8x16xf32>
    %137 = vector.extract_strided_slice %135 {offsets = [0, 16], sizes = [8, 16], strides = [1, 1]} : vector<8x64xf32> to vector<8x16xf32>
    %138 = vector.extract_strided_slice %135 {offsets = [0, 32], sizes = [8, 16], strides = [1, 1]} : vector<8x64xf32> to vector<8x16xf32>
    %cst_36 = arith.constant 2.000000e+00 : f32
    %139 = vector.broadcast %cst_36 : f32 to vector<8x16xf32>
    %140 = arith.mulf %139, %138 : vector<8x16xf32>
    %cst_37 = arith.constant 1.000000e+00 : f32
    %141 = vector.broadcast %cst_37 : f32 to vector<8x16xf32>
    %142 = arith.subf %140, %141 : vector<8x16xf32>
    %143 = vector.extract_strided_slice %135 {offsets = [0, 48], sizes = [8, 16], strides = [1, 1]} : vector<8x64xf32> to vector<8x16xf32>
    %144 = arith.mulf %137, %125 : vector<8x16xf32>
    %145 = arith.mulf %136, %142 : vector<8x16xf32>
    %146 = arith.addf %144, %145 : vector<8x16xf32>
    %147 = math.tanh %146 : vector<8x16xf32>
    %148 = arith.mulf %143, %147 : vector<8x16xf32>
    %149 = vector.extract_strided_slice %20 {offsets = [48, 0], sizes = [8, 64], strides = [1, 1]} : vector<64x128xf32> to vector<8x64xf32>
    %cst_38 = arith.constant dense<0.000000e+00> : vector<8x64xf32>
    %150 = tpu.matmul %148, %3, %cst_38 {dimension_numbers = #tpu.dot_dimension_numbers<[1], [0], [0], [1], [0, 0, 1, 1], [], []>} : vector<8x16xf32>, vector<16x64xf32>, vector<8x64xf32> -> vector<8x64xf32>
    %151 = arith.addf %149, %150 : vector<8x64xf32>
    %152 = arith.negf %151 : vector<8x64xf32>
    %153 = math.exp %152 : vector<8x64xf32>
    %cst_39 = arith.constant 1.000000e+00 : f32
    %154 = vector.broadcast %cst_39 : f32 to vector<8x64xf32>
    %155 = arith.addf %154, %153 : vector<8x64xf32>
    %156 = arith.divf %154, %155 : vector<8x64xf32>
    %157 = vector.extract_strided_slice %156 {offsets = [0, 0], sizes = [8, 16], strides = [1, 1]} : vector<8x64xf32> to vector<8x16xf32>
    %158 = vector.extract_strided_slice %156 {offsets = [0, 16], sizes = [8, 16], strides = [1, 1]} : vector<8x64xf32> to vector<8x16xf32>
    %159 = vector.extract_strided_slice %156 {offsets = [0, 32], sizes = [8, 16], strides = [1, 1]} : vector<8x64xf32> to vector<8x16xf32>
    %cst_40 = arith.constant 2.000000e+00 : f32
    %160 = vector.broadcast %cst_40 : f32 to vector<8x16xf32>
    %161 = arith.mulf %160, %159 : vector<8x16xf32>
    %cst_41 = arith.constant 1.000000e+00 : f32
    %162 = vector.broadcast %cst_41 : f32 to vector<8x16xf32>
    %163 = arith.subf %161, %162 : vector<8x16xf32>
    %164 = vector.extract_strided_slice %156 {offsets = [0, 48], sizes = [8, 16], strides = [1, 1]} : vector<8x64xf32> to vector<8x16xf32>
    %165 = arith.mulf %158, %146 : vector<8x16xf32>
    %166 = arith.mulf %157, %163 : vector<8x16xf32>
    %167 = arith.addf %165, %166 : vector<8x16xf32>
    %168 = math.tanh %167 : vector<8x16xf32>
    %169 = arith.mulf %164, %168 : vector<8x16xf32>
    %170 = vector.extract_strided_slice %20 {offsets = [56, 0], sizes = [8, 64], strides = [1, 1]} : vector<64x128xf32> to vector<8x64xf32>
    %cst_42 = arith.constant dense<0.000000e+00> : vector<8x64xf32>
    %171 = tpu.matmul %169, %3, %cst_42 {dimension_numbers = #tpu.dot_dimension_numbers<[1], [0], [0], [1], [0, 0, 1, 1], [], []>} : vector<8x16xf32>, vector<16x64xf32>, vector<8x64xf32> -> vector<8x64xf32>
    %172 = arith.addf %170, %171 : vector<8x64xf32>
    %173 = arith.negf %172 : vector<8x64xf32>
    %174 = math.exp %173 : vector<8x64xf32>
    %cst_43 = arith.constant 1.000000e+00 : f32
    %175 = vector.broadcast %cst_43 : f32 to vector<8x64xf32>
    %176 = arith.addf %175, %174 : vector<8x64xf32>
    %177 = arith.divf %175, %176 : vector<8x64xf32>
    %178 = vector.extract_strided_slice %177 {offsets = [0, 0], sizes = [8, 16], strides = [1, 1]} : vector<8x64xf32> to vector<8x16xf32>
    %179 = vector.extract_strided_slice %177 {offsets = [0, 16], sizes = [8, 16], strides = [1, 1]} : vector<8x64xf32> to vector<8x16xf32>
    %180 = vector.extract_strided_slice %177 {offsets = [0, 32], sizes = [8, 16], strides = [1, 1]} : vector<8x64xf32> to vector<8x16xf32>
    %cst_44 = arith.constant 2.000000e+00 : f32
    %181 = vector.broadcast %cst_44 : f32 to vector<8x16xf32>
    %182 = arith.mulf %181, %180 : vector<8x16xf32>
    %cst_45 = arith.constant 1.000000e+00 : f32
    %183 = vector.broadcast %cst_45 : f32 to vector<8x16xf32>
    %184 = arith.subf %182, %183 : vector<8x16xf32>
    %185 = vector.extract_strided_slice %177 {offsets = [0, 48], sizes = [8, 16], strides = [1, 1]} : vector<8x64xf32> to vector<8x16xf32>
    %186 = arith.mulf %179, %167 : vector<8x16xf32>
    %187 = arith.mulf %178, %184 : vector<8x16xf32>
    %188 = arith.addf %186, %187 : vector<8x16xf32>
    %189 = math.tanh %188 : vector<8x16xf32>
    %190 = arith.mulf %185, %189 : vector<8x16xf32>
    %191 = vector.extract_strided_slice %20 {offsets = [56, 64], sizes = [8, 64], strides = [1, 1]} : vector<64x128xf32> to vector<8x64xf32>
    %192 = arith.negf %191 : vector<8x64xf32>
    %193 = math.exp %192 : vector<8x64xf32>
    %cst_46 = arith.constant 1.000000e+00 : f32
    %194 = vector.broadcast %cst_46 : f32 to vector<8x64xf32>
    %195 = arith.addf %194, %193 : vector<8x64xf32>
    %196 = arith.divf %194, %195 : vector<8x64xf32>
    %197 = vector.extract_strided_slice %196 {offsets = [0, 0], sizes = [8, 16], strides = [1, 1]} : vector<8x64xf32> to vector<8x16xf32>
    %198 = vector.extract_strided_slice %196 {offsets = [0, 32], sizes = [8, 16], strides = [1, 1]} : vector<8x64xf32> to vector<8x16xf32>
    %cst_47 = arith.constant 2.000000e+00 : f32
    %199 = vector.broadcast %cst_47 : f32 to vector<8x16xf32>
    %200 = arith.mulf %199, %198 : vector<8x16xf32>
    %cst_48 = arith.constant 1.000000e+00 : f32
    %201 = vector.broadcast %cst_48 : f32 to vector<8x16xf32>
    %202 = arith.subf %200, %201 : vector<8x16xf32>
    %203 = vector.extract_strided_slice %196 {offsets = [0, 48], sizes = [8, 16], strides = [1, 1]} : vector<8x64xf32> to vector<8x16xf32>
    %204 = arith.mulf %197, %202 : vector<8x16xf32>
    %205 = math.tanh %204 : vector<8x16xf32>
    %206 = arith.mulf %203, %205 : vector<8x16xf32>
    %c0_49 = arith.constant 0 : index
    %c0_50 = arith.constant 0 : index
    %c0_51 = arith.constant 0 : index
    %207 = vector.load %arg2[%c0_49, %c0_50, %c0_51] : memref<1x8x8xf32, #tpu.memory_space<vmem>>, vector<1x8x8xf32>
    %208 = vector.shape_cast %207 : vector<1x8x8xf32> to vector<8x8xf32>
    %209 = tpu.concatenate %190, %206, %208 in 1 : vector<8x16xf32>, vector<8x16xf32>, vector<8x8xf32> -> vector<8x40xf32>
    %cst_52 = arith.constant dense<0.000000e+00> : vector<8x32xf32>
    %210 = tpu.matmul %209, %5, %cst_52 {dimension_numbers = #tpu.dot_dimension_numbers<[1], [0], [0], [1], [0, 0, 1, 1], [], []>} : vector<8x40xf32>, vector<40x32xf32>, vector<8x32xf32> -> vector<8x32xf32>
    %211 = vector.broadcast %7 : vector<1x32xf32> to vector<8x32xf32>
    %212 = arith.addf %210, %211 : vector<8x32xf32>
    %cst_53 = arith.constant 0.000000e+00 : f32
    %213 = vector.broadcast %cst_53 : f32 to vector<8x32xf32>
    %214 = arith.maximumf %212, %213 : vector<8x32xf32>
    %cst_54 = arith.constant dense<0.000000e+00> : vector<8x32xf32>
    %215 = tpu.matmul %214, %9, %cst_54 {dimension_numbers = #tpu.dot_dimension_numbers<[1], [0], [0], [1], [0, 0, 1, 1], [], []>} : vector<8x32xf32>, vector<32x32xf32>, vector<8x32xf32> -> vector<8x32xf32>
    %216 = vector.broadcast %11 : vector<1x32xf32> to vector<8x32xf32>
    %217 = arith.addf %215, %216 : vector<8x32xf32>
    %cst_55 = arith.constant 0.000000e+00 : f32
    %218 = vector.broadcast %cst_55 : f32 to vector<8x32xf32>
    %219 = arith.maximumf %217, %218 : vector<8x32xf32>
    %cst_56 = arith.constant dense<0.000000e+00> : vector<8x8xf32>
    %220 = tpu.matmul %219, %13, %cst_56 {dimension_numbers = #tpu.dot_dimension_numbers<[1], [0], [0], [1], [0, 0, 1, 1], [], []>} : vector<8x32xf32>, vector<32x8xf32>, vector<8x8xf32> -> vector<8x8xf32>
    %221 = vector.broadcast %15 : vector<1x8xf32> to vector<8x8xf32>
    %222 = arith.addf %220, %221 : vector<8x8xf32>
    %223 = math.tanh %222 : vector<8x8xf32>
    %cst_57 = arith.constant 1.000000e+00 : f32
    %224 = vector.broadcast %cst_57 : f32 to vector<8x8xf32>
    %225 = arith.mulf %224, %223 : vector<8x8xf32>
    %cst_58 = arith.constant 0.000000e+00 : f32
    %226 = vector.broadcast %cst_58 : f32 to vector<8x120xf32>
    %227 = tpu.concatenate %225, %226 in 1 : vector<8x8xf32>, vector<8x120xf32> -> vector<8x128xf32>
    %c0_59 = arith.constant 0 : index
    %c0_60 = arith.constant 0 : index
    %c0_61 = arith.constant 0 : index
    %228 = vector.load %arg4[%c0_59, %c0_60, %c0_61] : memref<1x8x128xf32, #tpu.memory_space<vmem>>, vector<1x8x128xf32>
    %229 = vector.shape_cast %228 : vector<1x8x128xf32> to vector<8x128xf32>
    %230 = vector.shape_cast %227 : vector<8x128xf32> to vector<1x8x128xf32>
    tpu.vector_store %arg4[%c0_59, %c0_60, %c0_61], %230 {strides = array<i32>} : memref<1x8x128xf32, #tpu.memory_space<vmem>>, vector<1x8x128xf32>,
    return
  }
  func.func @transform_0(%arg0: i32) -> (i32, i32, i32) {
    %c0_i32 = arith.constant 0 : i32
    %c0_i32_0 = arith.constant 0 : i32
    %c0_i32_1 = arith.constant 0 : i32
    return %arg0, %c0_i32, %c0_i32_0 : i32, i32, i32
  }
  func.func @transform_1(%arg0: i32) -> (i32, i32, i32) {
    %c0_i32 = arith.constant 0 : i32
    %c0_i32_0 = arith.constant 0 : i32
    %c0_i32_1 = arith.constant 0 : i32
    return %arg0, %c0_i32, %c0_i32_0 : i32, i32, i32
  }
  func.func @transform_2(%arg0: i32) -> (i32, i32) {
    %c0_i32 = arith.constant 0 : i32
    %c0_i32_0 = arith.constant 0 : i32
    %c0_i32_1 = arith.constant 0 : i32
    return %c0_i32, %c0_i32_0 : i32, i32
  }
  func.func @transform_3(%arg0: i32) -> (i32, i32, i32) {
    %c0_i32 = arith.constant 0 : i32
    %c0_i32_0 = arith.constant 0 : i32
    %c0_i32_1 = arith.constant 0 : i32
    return %arg0, %c0_i32, %c0_i32_0 : i32, i32, i32
  }
}

</mosaic_0001>

<llo_original>
// kernel: tpu_custom_call.1
$region0: #{tpu_custom_call.1}
  #allocation0 [shape = 'u32[]', space=smem, size = 0x4, offset = 0x4, fixed_abs, tag = 'smem constant byte address 0x4 - core index']
  #allocation1 [shape = 'u32[72,128]{1,0:T(1,128)}', space=vmem, size = 0x9000, scoped, tag = 'internal scratch']
  %s0 = inlined_call_operand.vmem [shape: f32[4,64,16], index: 0, kind: input, shape index: {}]
  %s1 = inlined_call_operand.vmem [shape: f32[4,8,8], index: 1, kind: input, shape index: {}]
  %s2 = inlined_call_operand.vmem [shape: f32[168,128], index: 2, kind: input, shape index: {}]
  %s3 = inlined_call_operand.hbm [shape: f32[4,8,128], index: 3, kind: output, shape index: {}]
  %s4 = sld [smem:[#allocation0]]
  $region45: #{tpu_custom_call.1} parent=0
    _
  %s6 = ssub.s32 1, %s4
  %s7 = scalar_select 0, %s6, %s4
  $region1: #{tpu_custom_call.1} parent=0
    #allocation2 [shape = 'u8[8192]{0}', space=vmem, size = 0x2000, scoped, tag = 'output window, operand 0']
    #allocation3 [shape = 's32[2]{0}', space=sflag, size = 0x8, scoped, tag = 'scoped memory for tpu_custom_call.1']
    %8 = vsyncpa [#allocation3], 0
    %s9 = scalar_lea.sflag [#allocation3], 1
    %10 = vsyncpa %s9, 0
    loop: start=0, step=1, limit=6
    $region2: #{tpu_custom_call.1} parent=1 // loop_pre_header
      _
    $region3: #{tpu_custom_call.1} parent=1 // loop_header
      %s12 = sphi 0, %s16
      %p13 = scmp.ge.s32.totalorder %s12, 6
      %s22 = sphi 0, %s24
      %s25 = sphi 0, %s22
      %s26 = sphi 0, %s25
      %s42 = sphi 0, %s26
      %s48 = sphi 0, %s50
      %s51 = sphi 0, %s48
      %s52 = sphi 0, %s51
      %s68 = sphi 0, %s52
      %s72 = sphi 0, %s72
      %s74 = sphi 0, %s72
      %s75 = sphi 0, %s74
      %s89 = sphi 0, %s75
      %s95 = sphi 0, %s97
      %s98 = sphi 0, %s95
      %s99 = sphi 0, %s98
      %s115 = sphi 0, %s99
    $region4: #{tpu_custom_call.1} parent=1 // loop_header_branch
      %15 = sbr.rel (%p13) target = $region8
    $region5: #{tpu_custom_call.1} parent=1 // loop_body
      %s17 = ssub.s32 %s12, 1
      %s18 = ssub.s32 %s12, 2
      %s19 = sadd.s32 %s12, 1
      %s20 = ssub.s32 %s12, %s19
      %p21 = scmp.eq.s32.totalorder %s20, 0
      %s23 = sadd.s32 %s22, 1
      %s24 = scalar_select %p21, %s22, %s23
      %p27 = pneg %p21
      %p28 = scmp.eq.s32.totalorder %s12, 3
      %p29 = por %p27, %p28
      %p30 = scmp.ne.s32.totalorder %s22, %s25
      %p31 = scmp.eq.s32.totalorder %s12, 0
      %p32 = por %p30, %p31
      %p33 = scmp.ne.s32.totalorder %s22, %s25
      %p34 = scmp.eq.s32.totalorder %s17, 3
      %p35 = por %p33, %p34
      %p36 = scmp.ne.s32.totalorder %s25, %s26
      %p37 = scmp.eq.s32.totalorder %s17, 0
      %p38 = por %p36, %p37
      %p39 = scmp.ne.s32.totalorder %s25, %s26
      %p40 = scmp.eq.s32.totalorder %s18, 3
      %p41 = por %p39, %p40
      %p43 = scmp.ne.s32.totalorder %s26, %s42
      %p44 = scmp.eq.s32.totalorder %s18, 0
      %p45 = por %p43, %p44
      %s46 = ssub.s32 %s12, %s19
      %p47 = scmp.eq.s32.totalorder %s46, 0
      %s49 = sadd.s32 %s48, 1
      %s50 = scalar_select %p47, %s48, %s49
      %p53 = pneg %p47
      %p54 = scmp.eq.s32.totalorder %s12, 3
      %p55 = por %p53, %p54
      %p56 = scmp.ne.s32.totalorder %s48, %s51
      %p57 = scmp.eq.s32.totalorder %s12, 0
      %p58 = por %p56, %p57
      %p59 = scmp.ne.s32.totalorder %s48, %s51
      %p60 = scmp.eq.s32.totalorder %s17, 3
      %p61 = por %p59, %p60
      %p62 = scmp.ne.s32.totalorder %s51, %s52
      %p63 = scmp.eq.s32.totalorder %s17, 0
      %p64 = por %p62, %p63
      %p65 = scmp.ne.s32.totalorder %s51, %s52
      %p66 = scmp.eq.s32.totalorder %s18, 3
      %p67 = por %p65, %p66
      %p69 = scmp.ne.s32.totalorder %s52, %s68
      %p70 = scmp.eq.s32.totalorder %s18, 0
      %p71 = por %p69, %p70
      %s73 = sadd.s32 %s72, 1
      %p76 = scmp.eq.s32.totalorder %s12, 3
      %p77 = scmp.ne.s32.totalorder %s72, %s74
      %p78 = scmp.eq.s32.totalorder %s12, 0
      %p79 = por %p77, %p78
      %p80 = scmp.ne.s32.totalorder %s72, %s74
      %p81 = scmp.eq.s32.totalorder %s17, 3
      %p82 = por %p80, %p81
      %p83 = scmp.ne.s32.totalorder %s74, %s75
      %p84 = scmp.eq.s32.totalorder %s17, 0
      %p85 = por %p83, %p84
      %p86 = scmp.ne.s32.totalorder %s74, %s75
      %p87 = scmp.eq.s32.totalorder %s18, 3
      %p88 = por %p86, %p87
      %p90 = scmp.ne.s32.totalorder %s75, %s89
      %p91 = scmp.eq.s32.totalorder %s18, 0
      %p92 = por %p90, %p91
      %s93 = ssub.s32 %s12, %s19
      %p94 = scmp.eq.s32.totalorder %s93, 0
      %s96 = sadd.s32 %s95, 1
      %s97 = scalar_select %p94, %s95, %s96
      %p100 = pneg %p94
      %p101 = scmp.eq.s32.totalorder %s12, 3
      %p102 = por %p100, %p101
      %p103 = scmp.ne.s32.totalorder %s95, %s98
      %p104 = scmp.eq.s32.totalorder %s12, 0
      %p105 = por %p103, %p104
      %p106 = scmp.ne.s32.totalorder %s95, %s98
      %p107 = scmp.eq.s32.totalorder %s17, 3
      %p108 = por %p106, %p107
      %p109 = scmp.ne.s32.totalorder %s98, %s99
      %p110 = scmp.eq.s32.totalorder %s17, 0
      %p111 = por %p109, %p110
      %p112 = scmp.ne.s32.totalorder %s98, %s99
      %p113 = scmp.eq.s32.totalorder %s18, 3
      %p114 = por %p112, %p113
      %p116 = scmp.ne.s32.totalorder %s99, %s115
      %p117 = scmp.eq.s32.totalorder %s18, 0
      %p118 = por %p116, %p117
      %p119 = scmp.le.s32.totalorder 1, %s12
      %p120 = scmp.lt.s32.totalorder %s12, 5
      %p121 = pnand %p119, %p120
      %p122 = pneg %p121
      // Predicated region
      $region9: #{tpu_custom_call.1} parent=5 // pred_check
        _
      $region10: #{tpu_custom_call.1} parent=5 // pred_check_branch
        %124 = sbr.rel (%p121) target = $region12
      $region11: #{tpu_custom_call.1} parent=5 // pred_region
        %s125 = ssub.s32 %s12, 1
        // Predicated region
        $region13: #{tpu_custom_call.1} parent=11 // pred_check
          %p126 = pneg %p85
        $region14: #{tpu_custom_call.1} parent=11 // pred_check_branch
          %128 = sbr.rel (%p126) target = $region16
        $region15: #{tpu_custom_call.1} parent=11 // pred_region
          _
        $region16: #{tpu_custom_call.1} parent=11 // pred_fallthru
          _
      $region12: #{tpu_custom_call.1} parent=5 // pred_fallthru
        _
      %p129 = scmp.lt.s32.totalorder %s12, 4
      // Predicated region
      $region17: #{tpu_custom_call.1} parent=5 // pred_check
        %p130 = pneg %p129
      $region18: #{tpu_custom_call.1} parent=5 // pred_check_branch
        %132 = sbr.rel (%p130) target = $region20
      $region19: #{tpu_custom_call.1} parent=5 // pred_region
        // Predicated region
        $region21: #{tpu_custom_call.1} parent=19 // pred_check
          %p133 = pneg %p32
        $region22: #{tpu_custom_call.1} parent=19 // pred_check_branch
          %135 = sbr.rel (%p133) target = $region24
        $region23: #{tpu_custom_call.1} parent=19 // pred_region
          %p136 = scmp.lt.s32.totalorder %s12, 3
          %s137 = scalar_select %p136, %s12, 3
          %s138 = smul.addr %s137, 8
          %s139 = smul.addr %s138, 8
          %s140 = scalar_lea.vmem %s0, %s139
        $region24: #{tpu_custom_call.1} parent=19 // pred_fallthru
          _
        // Predicated region
        $region25: #{tpu_custom_call.1} parent=19 // pred_check
          %p141 = pneg %p58
        $region26: #{tpu_custom_call.1} parent=19 // pred_check_branch
          %143 = sbr.rel (%p141) target = $region28
        $region27: #{tpu_custom_call.1} parent=19 // pred_region
          %p144 = scmp.lt.s32.totalorder %s12, 3
          %s145 = scalar_select %p144, %s12, 3
          %s146 = smul.addr %s145, 8
          %s147 = scalar_lea.vmem %s1, %s146
        $region28: #{tpu_custom_call.1} parent=19 // pred_fallthru
          _
      $region20: #{tpu_custom_call.1} parent=5 // pred_fallthru
        _
      %p148 = scmp.le.s32.totalorder 1, %s12
      %p149 = scmp.lt.s32.totalorder %s12, 5
      %p150 = pnand %p148, %p149
      %p151 = pneg %p150
      // Predicated region
      $region29: #{tpu_custom_call.1} parent=5 // pred_check
        _
      $region30: #{tpu_custom_call.1} parent=5 // pred_check_branch
        %153 = sbr.rel (%p150) target = $region32
      $region31: #{tpu_custom_call.1} parent=5 // pred_region
        %s154 = ssub.s32 %s12, 1
        %p155 = scmp.lt.s32.totalorder %s17, 3
        %s156 = scalar_select %p155, %s17, 3
        %s157 = smul.addr %s156, 8
        %s158 = smul.addr %s157, 8
        %s159 = scalar_lea.vmem %s0, %s158
        %p160 = pneg %p38
        %p161 = pneg %p35
        %p162 = scmp.lt.s32.totalorder %s17, 3
        %s163 = scalar_select %p162, %s17, 3
        %s164 = smul.addr %s163, 8
        %s165 = scalar_lea.vmem %s1, %s164
        %p166 = pneg %p64
        %p167 = pneg %p61
        %p168 = pneg %p85
        %p169 = pneg %p82
        %p170 = pneg %p111
        %p171 = pneg %p108
        %s172 = sand.u32 %s98, 1
        %s173 = scalar_lea.sflag [#allocation3], %s172
        %s174 = sand.u32 %s98, 1
        %s175 = smul.addr %s174, 8
        %s176 = scalar_lea.vmem [#allocation2], %s175
        %p177 = scmp.lt.s32.totalorder %s17, 3
        %s178 = scalar_select %p177, %s17, 3
        %s179 = smul.addr %s178, 8
        %s180 = smul.addr %s179, 8
        %s181 = scalar_lea.vmem %s0, %s180
        %p182 = scmp.lt.s32.totalorder %s17, 3
        %s183 = scalar_select %p182, %s17, 3
        %s184 = smul.addr %s183, 8
        %s185 = scalar_lea.vmem %s1, %s184
        %v186 = vld [vmem:[%s2] sm:$0xff]
        %v187 = vld [vmem:[%s2 + $0x8] sm:$0xff]
        %v188 = vld [vmem:[%s2 + $0x10] sm:$0x1]
        %v189 = vld [vmem:[%s2 + $0x18] sm:$0xff]
        %v190 = vld [vmem:[%s2 + $0x20] sm:$0xff]
        %v191 = vld [vmem:[%s2 + $0x28] sm:$0xff]
        %v192 = vld [vmem:[%s2 + $0x30] sm:$0xff]
        %v193 = vld [vmem:[%s2 + $0x38] sm:$0xff]
        %v194 = vld [vmem:[%s2 + $0x40] sm:$0xff]
        %v195 = vld [vmem:[%s2 + $0x48] sm:$0xff]
        %v196 = vld [vmem:[%s2 + $0x50] sm:$0x1]
        %v197 = vld [vmem:[%s2 + $0x58] sm:$0xff]
        %v198 = vld [vmem:[%s2 + $0x60] sm:$0xff]
        %v199 = vld [vmem:[%s2 + $0x68] sm:$0xff]
        %v200 = vld [vmem:[%s2 + $0x70] sm:$0xff]
        %v201 = vld [vmem:[%s2 + $0x78] sm:$0x1]
        %v202 = vld [vmem:[%s2 + $0x80] sm:$0xff]
        %v203 = vld [vmem:[%s2 + $0x88] sm:$0xff]
        %v204 = vld [vmem:[%s2 + $0x90] sm:$0xff]
        %v205 = vld [vmem:[%s2 + $0x98] sm:$0xff]
        %v206 = vld [vmem:[%s2 + $0xa0] sm:$0x1]
        %v207 = vld [vmem:[%s181] sm:$0xff]
        %v208 = vld [vmem:[%s181 + $0x8] sm:$0xff]
        %v209 = vld [vmem:[%s181 + $0x10] sm:$0xff]
        %v210 = vld [vmem:[%s181 + $0x18] sm:$0xff]
        %v211 = vld [vmem:[%s181 + $0x20] sm:$0xff]
        %v212 = vld [vmem:[%s181 + $0x28] sm:$0xff]
        %v213 = vld [vmem:[%s181 + $0x30] sm:$0xff]
        %v214 = vld [vmem:[%s181 + $0x38] sm:$0xff]
        %v215 = vperm.slane %v188, 0
        %vm216 = vcmask 130048
        %v218 = vsel %vm216, %v207, 0
        %v221 = vsel %vm216, %v208, 0
        %v224 = vsel %vm216, %v209, 0
        %v227 = vsel %vm216, %v210, 0
        %v230 = vsel %vm216, %v211, 0
        %v233 = vsel %vm216, %v212, 0
        %v236 = vsel %vm216, %v213, 0
        %v239 = vsel %vm216, %v214, 0
        %241 = vmatpush.msra.mxu0 0.0
        %242 = vmatpush.msra.mxu0 0.0
        %243 = vmatpush.msra.mxu0 0.0
        %244 = vmatpush.msra.mxu0 0.0
        %245 = vmatpush.msra.mxu0 0.0
        %246 = vmatpush.msra.mxu0 0.0
        %247 = vmatpush.msra.mxu0 0.0
        %248 = vmatpush.msra.mxu0 0.0
        %249 = vmatpush.msra.mxu0 0.0
        %250 = vmatpush.msra.mxu0 0.0
        %251 = vmatpush.msra.mxu0 0.0
        %252 = vmatpush.msra.mxu0 0.0
        %253 = vmatpush.msra.mxu0 0.0
        %254 = vmatpush.msra.mxu0 0.0
        %255 = vmatpush.msra.mxu0 %v187
        %256 = vmatpush.msra.mxu0 %v186
        %257 = vmatmul.f32.gmra.mxu0 %v218
        %v258 = vpop.f32.mrf.mxu0
        %v259 = vadd.f32 %v215, %v258
        %260 = vmatmul.f32.gmra.mxu0 %v221
        %v261 = vpop.f32.mrf.mxu0
        %v262 = vadd.f32 %v215, %v261
        %263 = vmatmul.f32.gmra.mxu0 %v224
        %v264 = vpop.f32.mrf.mxu0
        %v265 = vadd.f32 %v215, %v264
        %266 = vmatmul.f32.gmra.mxu0 %v227
        %v267 = vpop.f32.mrf.mxu0
        %v268 = vadd.f32 %v215, %v267
        %269 = vmatmul.f32.gmra.mxu0 %v230
        %v270 = vpop.f32.mrf.mxu0
        %v271 = vadd.f32 %v215, %v270
        %272 = vmatmul.f32.gmra.mxu0 %v233
        %v273 = vpop.f32.mrf.mxu0
        %v274 = vadd.f32 %v215, %v273
        %275 = vmatmul.f32.gmra.mxu0 %v236
        %v276 = vpop.f32.mrf.mxu0
        %v277 = vadd.f32 %v215, %v276
        %278 = vmatmul.f32.gmra.mxu0 %v239
        %v279 = vpop.f32.mrf.mxu0
        %v280 = vadd.f32 %v215, %v279
        %281 = vdwg.mxu0
        %v283 = vsel %vm216, 0.0, 0
        %285 = vmatpush.msra.mxu0 0.0
        %286 = vmatpush.msra.mxu0 0.0
        %287 = vmatpush.msra.mxu0 0.0
        %288 = vmatpush.msra.mxu0 0.0
        %289 = vmatpush.msra.mxu0 0.0
        %290 = vmatpush.msra.mxu0 0.0
        %291 = vmatpush.msra.mxu0 0.0
        %292 = vmatpush.msra.mxu0 0.0
        %293 = vmatpush.msra.mxu0 0.0
        %294 = vmatpush.msra.mxu0 0.0
        %295 = vmatpush.msra.mxu0 0.0
        %296 = vmatpush.msra.mxu0 0.0
        %297 = vmatpush.msra.mxu0 0.0
        %298 = vmatpush.msra.mxu0 0.0
        %299 = vmatpush.msra.mxu0 %v190
        %300 = vmatpush.msra.mxu0 %v189
        %301 = vmatmul.f32.gmra.mxu0 %v283
        %v302 = vpop.f32.mrf.mxu0
        %v303 = vadd.f32 0.0, %v302
        %304 = vdwg.mxu0
        %v305 = vadd.f32 %v259, %v303
        %v306 = vxor.u32 %v305, 2147483648
        %v307 = vmul.f32 %v306, 1.442695
        %v308 = vpow.pop %v307
        %v309 = vadd.f32 %v308, 1.0
        %v310 = vrcp.pop %v309
        %v311 = vmul.f32 %v309, %v310
        %v312 = vsub.f32 1.0, %v311
        %v313 = vmul.f32 %v310, %v312
        %v314 = vadd.f32 %v310, %v313
        %vm315 = vweird.f32 %v309
        %vm316 = vweird.f32 %v310
        %vm317 = vmor %vm315, %vm316
        %v318 = vsel %vm317, %v310, %v314
        %v319 = vand.u32 2147483647, %v309
        %vm320 = vcmp.eq.f32.partialorder %v319, 8.507059e+37
        %v321 = vand.u32 %v309, 2147483648
        %v322 = vor.u32 1.1754944e-38, %v321
        %v323 = vsel %vm320, %v322, %v318
        %v324 = vmul.f32 1.0, %v323
        %v325 = vmul.f32 %v324, 2.0
        %v326 = vsub.f32 %v325, 1.0
        %v327 = vmul.f32 %v324, 0.0
        %329 = vrot.lane.b32.xlu0 %v326, 96
        %v330 = vpop.permute.xlu0 %329
        %v332 = vmul.f32 %v324, %v330
        %334 = vrot.lane.b32.xlu0 %v332, 16
        %v335 = vpop.permute.xlu0 %334
        %v337 = vadd.f32 %v327, %v335
        %v338 = vtanh.pop %v337
        %340 = vrot.lane.b32.xlu0 %v338, 32
        %v341 = vpop.permute.xlu0 %340
        %v343 = vmul.f32 %v324, %v341
        %345 = vrot.lane.b32.xlu0 %v343, 80
        %v346 = vpop.permute.xlu0 %345
        %v347 = vsel %vm216, %v346, 0
        %349 = vmatpush.msra.mxu0 0.0
        %350 = vmatpush.msra.mxu0 0.0
        %351 = vmatpush.msra.mxu0 0.0
        %352 = vmatpush.msra.mxu0 0.0
        %353 = vmatpush.msra.mxu0 0.0
        %354 = vmatpush.msra.mxu0 0.0
        %355 = vmatpush.msra.mxu0 0.0
        %356 = vmatpush.msra.mxu0 0.0
        %357 = vmatpush.msra.mxu0 0.0
        %358 = vmatpush.msra.mxu0 0.0
        %359 = vmatpush.msra.mxu0 0.0
        %360 = vmatpush.msra.mxu0 0.0
        %361 = vmatpush.msra.mxu0 0.0
        %362 = vmatpush.msra.mxu0 0.0
        %363 = vmatpush.msra.mxu0 %v190
        %364 = vmatpush.msra.mxu0 %v189
        %365 = vmatmul.f32.gmra.mxu0 %v347
        %v366 = vpop.f32.mrf.mxu0
        %v367 = vadd.f32 0.0, %v366
        %368 = vdwg.mxu0
        %v369 = vadd.f32 %v262, %v367
        %v370 = vxor.u32 %v369, 2147483648
        %v371 = vmul.f32 %v370, 1.442695
        %v372 = vpow.pop %v371
        %v373 = vadd.f32 %v372, 1.0
        %v374 = vrcp.pop %v373
        %v375 = vmul.f32 %v373, %v374
        %v376 = vsub.f32 1.0, %v375
        %v377 = vmul.f32 %v374, %v376
        %v378 = vadd.f32 %v374, %v377
        %vm379 = vweird.f32 %v373
        %vm380 = vweird.f32 %v374
        %vm381 = vmor %vm379, %vm380
        %v382 = vsel %vm381, %v374, %v378
        %v383 = vand.u32 2147483647, %v373
        %vm384 = vcmp.eq.f32.partialorder %v383, 8.507059e+37
        %v385 = vand.u32 %v373, 2147483648
        %v386 = vor.u32 1.1754944e-38, %v385
        %v387 = vsel %vm384, %v386, %v382
        %v388 = vmul.f32 1.0, %v387
        %v389 = vmul.f32 %v388, 2.0
        %v390 = vsub.f32 %v389, 1.0
        %v391 = vmul.f32 %v388, %v337
        %393 = vrot.lane.b32.xlu0 %v390, 96
        %v394 = vpop.permute.xlu0 %393
        %v396 = vmul.f32 %v388, %v394
        %398 = vrot.lane.b32.xlu0 %v396, 16
        %v399 = vpop.permute.xlu0 %398
        %v401 = vadd.f32 %v391, %v399
        %v402 = vtanh.pop %v401
        %404 = vrot.lane.b32.xlu0 %v402, 32
        %v405 = vpop.permute.xlu0 %404
        %v407 = vmul.f32 %v388, %v405
        %409 = vrot.lane.b32.xlu0 %v407, 80
        %v410 = vpop.permute.xlu0 %409
        %v411 = vsel %vm216, %v410, 0
        %413 = vmatpush.msra.mxu0 0.0
        %414 = vmatpush.msra.mxu0 0.0
        %415 = vmatpush.msra.mxu0 0.0
        %416 = vmatpush.msra.mxu0 0.0
        %417 = vmatpush.msra.mxu0 0.0
        %418 = vmatpush.msra.mxu0 0.0
        %419 = vmatpush.msra.mxu0 0.0
        %420 = vmatpush.msra.mxu0 0.0
        %421 = vmatpush.msra.mxu0 0.0
        %422 = vmatpush.msra.mxu0 0.0
        %423 = vmatpush.msra.mxu0 0.0
        %424 = vmatpush.msra.mxu0 0.0
        %425 = vmatpush.msra.mxu0 0.0
        %426 = vmatpush.msra.mxu0 0.0
        %427 = vmatpush.msra.mxu0 %v190
        %428 = vmatpush.msra.mxu0 %v189
        %429 = vmatmul.f32.gmra.mxu0 %v411
        %v430 = vpop.f32.mrf.mxu0
        %v431 = vadd.f32 0.0, %v430
        %432 = vdwg.mxu0
        %v433 = vadd.f32 %v265, %v431
        %v434 = vxor.u32 %v433, 2147483648
        %v435 = vmul.f32 %v434, 1.442695
        %v436 = vpow.pop %v435
        %v437 = vadd.f32 %v436, 1.0
        %v438 = vrcp.pop %v437
        %v439 = vmul.f32 %v437, %v438
        %v440 = vsub.f32 1.0, %v439
        %v441 = vmul.f32 %v438, %v440
        %v442 = vadd.f32 %v438, %v441
        %vm443 = vweird.f32 %v437
        %vm444 = vweird.f32 %v438
        %vm445 = vmor %vm443, %vm444
        %v446 = vsel %vm445, %v438, %v442
        %v447 = vand.u32 2147483647, %v437
        %vm448 = vcmp.eq.f32.partialorder %v447, 8.507059e+37
        %v449 = vand.u32 %v437, 2147483648
        %v450 = vor.u32 1.1754944e-38, %v449
        %v451 = vsel %vm448, %v450, %v446
        %v452 = vmul.f32 1.0, %v451
        %v453 = vmul.f32 %v452, 2.0
        %v454 = vsub.f32 %v453, 1.0
        %v455 = vmul.f32 %v452, %v401
        %457 = vrot.lane.b32.xlu0 %v454, 96
        %v458 = vpop.permute.xlu0 %457
        %v460 = vmul.f32 %v452, %v458
        %462 = vrot.lane.b32.xlu0 %v460, 16
        %v463 = vpop.permute.xlu0 %462
        %v465 = vadd.f32 %v455, %v463
        %v466 = vtanh.pop %v465
        %468 = vrot.lane.b32.xlu0 %v466, 32
        %v469 = vpop.permute.xlu0 %468
        %v471 = vmul.f32 %v452, %v469
        %473 = vrot.lane.b32.xlu0 %v471, 80
        %v474 = vpop.permute.xlu0 %473
        %v475 = vsel %vm216, %v474, 0
        %477 = vmatpush.msra.mxu0 0.0
        %478 = vmatpush.msra.mxu0 0.0
        %479 = vmatpush.msra.mxu0 0.0
        %480 = vmatpush.msra.mxu0 0.0
        %481 = vmatpush.msra.mxu0 0.0
        %482 = vmatpush.msra.mxu0 0.0
        %483 = vmatpush.msra.mxu0 0.0
        %484 = vmatpush.msra.mxu0 0.0
        %485 = vmatpush.msra.mxu0 0.0
        %486 = vmatpush.msra.mxu0 0.0
        %487 = vmatpush.msra.mxu0 0.0
        %488 = vmatpush.msra.mxu0 0.0
        %489 = vmatpush.msra.mxu0 0.0
        %490 = vmatpush.msra.mxu0 0.0
        %491 = vmatpush.msra.mxu0 %v190
        %492 = vmatpush.msra.mxu0 %v189
        %493 = vmatmul.f32.gmra.mxu0 %v475
        %v494 = vpop.f32.mrf.mxu0
        %v495 = vadd.f32 0.0, %v494
        %496 = vdwg.mxu0
        %v497 = vadd.f32 %v268, %v495
        %v498 = vxor.u32 %v497, 2147483648
        %v499 = vmul.f32 %v498, 1.442695
        %v500 = vpow.pop %v499
        %v501 = vadd.f32 %v500, 1.0
        %v502 = vrcp.pop %v501
        %v503 = vmul.f32 %v501, %v502
        %v504 = vsub.f32 1.0, %v503
        %v505 = vmul.f32 %v502, %v504
        %v506 = vadd.f32 %v502, %v505
        %vm507 = vweird.f32 %v501
        %vm508 = vweird.f32 %v502
        %vm509 = vmor %vm507, %vm508
        %v510 = vsel %vm509, %v502, %v506
        %v511 = vand.u32 2147483647, %v501
        %vm512 = vcmp.eq.f32.partialorder %v511, 8.507059e+37
        %v513 = vand.u32 %v501, 2147483648
        %v514 = vor.u32 1.1754944e-38, %v513
        %v515 = vsel %vm512, %v514, %v510
        %v516 = vmul.f32 1.0, %v515
        %v517 = vmul.f32 %v516, 2.0
        %v518 = vsub.f32 %v517, 1.0
        %v519 = vmul.f32 %v516, %v465
        %521 = vrot.lane.b32.xlu0 %v518, 96
        %v522 = vpop.permute.xlu0 %521
        %v524 = vmul.f32 %v516, %v522
        %526 = vrot.lane.b32.xlu0 %v524, 16
        %v527 = vpop.permute.xlu0 %526
        %v529 = vadd.f32 %v519, %v527
        %v530 = vtanh.pop %v529
        %532 = vrot.lane.b32.xlu0 %v530, 32
        %v533 = vpop.permute.xlu0 %532
        %v535 = vmul.f32 %v516, %v533
        %537 = vrot.lane.b32.xlu0 %v535, 80
        %v538 = vpop.permute.xlu0 %537
        %v539 = vsel %vm216, %v538, 0
        %541 = vmatpush.msra.mxu0 0.0
        %542 = vmatpush.msra.mxu0 0.0
        %543 = vmatpush.msra.mxu0 0.0
        %544 = vmatpush.msra.mxu0 0.0
        %545 = vmatpush.msra.mxu0 0.0
        %546 = vmatpush.msra.mxu0 0.0
        %547 = vmatpush.msra.mxu0 0.0
        %548 = vmatpush.msra.mxu0 0.0
        %549 = vmatpush.msra.mxu0 0.0
        %550 = vmatpush.msra.mxu0 0.0
        %551 = vmatpush.msra.mxu0 0.0
        %552 = vmatpush.msra.mxu0 0.0
        %553 = vmatpush.msra.mxu0 0.0
        %554 = vmatpush.msra.mxu0 0.0
        %555 = vmatpush.msra.mxu0 %v190
        %556 = vmatpush.msra.mxu0 %v189
        %557 = vmatmul.f32.gmra.mxu0 %v539
        %v558 = vpop.f32.mrf.mxu0
        %v559 = vadd.f32 0.0, %v558
        %560 = vdwg.mxu0
        %v561 = vadd.f32 %v271, %v559
        %v562 = vxor.u32 %v561, 2147483648
        %v563 = vmul.f32 %v562, 1.442695
        %v564 = vpow.pop %v563
        %v565 = vadd.f32 %v564, 1.0
        %v566 = vrcp.pop %v565
        %v567 = vmul.f32 %v565, %v566
        %v568 = vsub.f32 1.0, %v567
        %v569 = vmul.f32 %v566, %v568
        %v570 = vadd.f32 %v566, %v569
        %vm571 = vweird.f32 %v565
        %vm572 = vweird.f32 %v566
        %vm573 = vmor %vm571, %vm572
        %v574 = vsel %vm573, %v566, %v570
        %v575 = vand.u32 2147483647, %v565
        %vm576 = vcmp.eq.f32.partialorder %v575, 8.507059e+37
        %v577 = vand.u32 %v565, 2147483648
        %v578 = vor.u32 1.1754944e-38, %v577
        %v579 = vsel %vm576, %v578, %v574
        %v580 = vmul.f32 1.0, %v579
        %v581 = vmul.f32 %v580, 2.0
        %v582 = vsub.f32 %v581, 1.0
        %v583 = vmul.f32 %v580, %v529
        %585 = vrot.lane.b32.xlu0 %v582, 96
        %v586 = vpop.permute.xlu0 %585
        %v588 = vmul.f32 %v580, %v586
        %590 = vrot.lane.b32.xlu0 %v588, 16
        %v591 = vpop.permute.xlu0 %590
        %v593 = vadd.f32 %v583, %v591
        %v594 = vtanh.pop %v593
        %596 = vrot.lane.b32.xlu0 %v594, 32
        %v597 = vpop.permute.xlu0 %596
        %v599 = vmul.f32 %v580, %v597
        %601 = vrot.lane.b32.xlu0 %v599, 80
        %v602 = vpop.permute.xlu0 %601
        %v603 = vsel %vm216, %v602, 0
        %605 = vmatpush.msra.mxu0 0.0
        %606 = vmatpush.msra.mxu0 0.0
        %607 = vmatpush.msra.mxu0 0.0
        %608 = vmatpush.msra.mxu0 0.0
        %609 = vmatpush.msra.mxu0 0.0
        %610 = vmatpush.msra.mxu0 0.0
        %611 = vmatpush.msra.mxu0 0.0
        %612 = vmatpush.msra.mxu0 0.0
        %613 = vmatpush.msra.mxu0 0.0
        %614 = vmatpush.msra.mxu0 0.0
        %615 = vmatpush.msra.mxu0 0.0
        %616 = vmatpush.msra.mxu0 0.0
        %617 = vmatpush.msra.mxu0 0.0
        %618 = vmatpush.msra.mxu0 0.0
        %619 = vmatpush.msra.mxu0 %v190
        %620 = vmatpush.msra.mxu0 %v189
        %621 = vmatmul.f32.gmra.mxu0 %v603
        %v622 = vpop.f32.mrf.mxu0
        %v623 = vadd.f32 0.0, %v622
        %624 = vdwg.mxu0
        %v625 = vadd.f32 %v274, %v623
        %v626 = vxor.u32 %v625, 2147483648
        %v627 = vmul.f32 %v626, 1.442695
        %v628 = vpow.pop %v627
        %v629 = vadd.f32 %v628, 1.0
        %v630 = vrcp.pop %v629
        %v631 = vmul.f32 %v629, %v630
        %v632 = vsub.f32 1.0, %v631
        %v633 = vmul.f32 %v630, %v632
        %v634 = vadd.f32 %v630, %v633
        %vm635 = vweird.f32 %v629
        %vm636 = vweird.f32 %v630
        %vm637 = vmor %vm635, %vm636
        %v638 = vsel %vm637, %v630, %v634
        %v639 = vand.u32 2147483647, %v629
        %vm640 = vcmp.eq.f32.partialorder %v639, 8.507059e+37
        %v641 = vand.u32 %v629, 2147483648
        %v642 = vor.u32 1.1754944e-38, %v641
        %v643 = vsel %vm640, %v642, %v638
        %v644 = vmul.f32 1.0, %v643
        %v645 = vmul.f32 %v644, 2.0
        %v646 = vsub.f32 %v645, 1.0
        %v647 = vmul.f32 %v644, %v593
        %649 = vrot.lane.b32.xlu0 %v646, 96
        %v650 = vpop.permute.xlu0 %649
        %v652 = vmul.f32 %v644, %v650
        %654 = vrot.lane.b32.xlu0 %v652, 16
        %v655 = vpop.permute.xlu0 %654
        %v657 = vadd.f32 %v647, %v655
        %v658 = vtanh.pop %v657
        %660 = vrot.lane.b32.xlu0 %v658, 32
        %v661 = vpop.permute.xlu0 %660
        %v663 = vmul.f32 %v644, %v661
        %665 = vrot.lane.b32.xlu0 %v663, 80
        %v666 = vpop.permute.xlu0 %665
        %v667 = vsel %vm216, %v666, 0
        %669 = vmatpush.msra.mxu0 0.0
        %670 = vmatpush.msra.mxu0 0.0
        %671 = vmatpush.msra.mxu0 0.0
        %672 = vmatpush.msra.mxu0 0.0
        %673 = vmatpush.msra.mxu0 0.0
        %674 = vmatpush.msra.mxu0 0.0
        %675 = vmatpush.msra.mxu0 0.0
        %676 = vmatpush.msra.mxu0 0.0
        %677 = vmatpush.msra.mxu0 0.0
        %678 = vmatpush.msra.mxu0 0.0
        %679 = vmatpush.msra.mxu0 0.0
        %680 = vmatpush.msra.mxu0 0.0
        %681 = vmatpush.msra.mxu0 0.0
        %682 = vmatpush.msra.mxu0 0.0
        %683 = vmatpush.msra.mxu0 %v190
        %684 = vmatpush.msra.mxu0 %v189
        %685 = vmatmul.f32.gmra.mxu0 %v667
        %v686 = vpop.f32.mrf.mxu0
        %v687 = vadd.f32 0.0, %v686
        %688 = vdwg.mxu0
        %v689 = vadd.f32 %v277, %v687
        %v690 = vxor.u32 %v689, 2147483648
        %v691 = vmul.f32 %v690, 1.442695
        %v692 = vpow.pop %v691
        %v693 = vadd.f32 %v692, 1.0
        %v694 = vrcp.pop %v693
        %v695 = vmul.f32 %v693, %v694
        %v696 = vsub.f32 1.0, %v695
        %v697 = vmul.f32 %v694, %v696
        %v698 = vadd.f32 %v694, %v697
        %vm699 = vweird.f32 %v693
        %vm700 = vweird.f32 %v694
        %vm701 = vmor %vm699, %vm700
        %v702 = vsel %vm701, %v694, %v698
        %v703 = vand.u32 2147483647, %v693
        %vm704 = vcmp.eq.f32.partialorder %v703, 8.507059e+37
        %v705 = vand.u32 %v693, 2147483648
        %v706 = vor.u32 1.1754944e-38, %v705
        %v707 = vsel %vm704, %v706, %v702
        %v708 = vmul.f32 1.0, %v707
        %v709 = vmul.f32 %v708, 2.0
        %v710 = vsub.f32 %v709, 1.0
        %v711 = vmul.f32 %v708, %v657
        %713 = vrot.lane.b32.xlu0 %v710, 96
        %v714 = vpop.permute.xlu0 %713
        %v716 = vmul.f32 %v708, %v714
        %718 = vrot.lane.b32.xlu0 %v716, 16
        %v719 = vpop.permute.xlu0 %718
        %v721 = vadd.f32 %v711, %v719
        %v722 = vtanh.pop %v721
        %724 = vrot.lane.b32.xlu0 %v722, 32
        %v725 = vpop.permute.xlu0 %724
        %v727 = vmul.f32 %v708, %v725
        %729 = vrot.lane.b32.xlu0 %v727, 80
        %v730 = vpop.permute.xlu0 %729
        %v731 = vsel %vm216, %v730, 0
        %733 = vmatpush.msra.mxu0 0.0
        %734 = vmatpush.msra.mxu0 0.0
        %735 = vmatpush.msra.mxu0 0.0
        %736 = vmatpush.msra.mxu0 0.0
        %737 = vmatpush.msra.mxu0 0.0
        %738 = vmatpush.msra.mxu0 0.0
        %739 = vmatpush.msra.mxu0 0.0
        %740 = vmatpush.msra.mxu0 0.0
        %741 = vmatpush.msra.mxu0 0.0
        %742 = vmatpush.msra.mxu0 0.0
        %743 = vmatpush.msra.mxu0 0.0
        %744 = vmatpush.msra.mxu0 0.0
        %745 = vmatpush.msra.mxu0 0.0
        %746 = vmatpush.msra.mxu0 0.0
        %747 = vmatpush.msra.mxu0 %v190
        %748 = vmatpush.msra.mxu0 %v189
        %749 = vmatmul.f32.gmra.mxu0 %v731
        %v750 = vpop.f32.mrf.mxu0
        %v751 = vadd.f32 0.0, %v750
        %752 = vdwg.mxu0
        %v753 = vadd.f32 %v280, %v751
        %v754 = vxor.u32 %v753, 2147483648
        %v755 = vmul.f32 %v754, 1.442695
        %v756 = vpow.pop %v755
        %v757 = vadd.f32 %v756, 1.0
        %v758 = vrcp.pop %v757
        %v759 = vmul.f32 %v757, %v758
        %v760 = vsub.f32 1.0, %v759
        %v761 = vmul.f32 %v758, %v760
        %v762 = vadd.f32 %v758, %v761
        %vm763 = vweird.f32 %v757
        %vm764 = vweird.f32 %v758
        %vm765 = vmor %vm763, %vm764
        %v766 = vsel %vm765, %v758, %v762
        %v767 = vand.u32 2147483647, %v757
        %vm768 = vcmp.eq.f32.partialorder %v767, 8.507059e+37
        %v769 = vand.u32 %v757, 2147483648
        %v770 = vor.u32 1.1754944e-38, %v769
        %v771 = vsel %vm768, %v770, %v766
        %v772 = vmul.f32 1.0, %v771
        %v773 = vmul.f32 %v772, 2.0
        %v774 = vsub.f32 %v773, 1.0
        %v775 = vmul.f32 %v772, %v721
        %777 = vrot.lane.b32.xlu0 %v774, 96
        %v778 = vpop.permute.xlu0 %777
        %v780 = vmul.f32 %v772, %v778
        %782 = vrot.lane.b32.xlu0 %v780, 16
        %v783 = vpop.permute.xlu0 %782
        %v785 = vadd.f32 %v775, %v783
        %v786 = vtanh.pop %v785
        %788 = vrot.lane.b32.xlu0 %v786, 32
        %v789 = vpop.permute.xlu0 %788
        %v791 = vmul.f32 %v772, %v789
        %v792 = vxor.u32 %v280, 2147483648
        %v793 = vmul.f32 %v792, 1.442695
        %v794 = vpow.pop %v793
        %v795 = vadd.f32 %v794, 1.0
        %v796 = vrcp.pop %v795
        %v797 = vmul.f32 %v795, %v796
        %v798 = vsub.f32 1.0, %v797
        %v799 = vmul.f32 %v796, %v798
        %v800 = vadd.f32 %v796, %v799
        %vm801 = vweird.f32 %v795
        %vm802 = vweird.f32 %v796
        %vm803 = vmor %vm801, %vm802
        %v804 = vsel %vm803, %v796, %v800
        %v805 = vand.u32 2147483647, %v795
        %vm806 = vcmp.eq.f32.partialorder %v805, 8.507059e+37
        %v807 = vand.u32 %v795, 2147483648
        %v808 = vor.u32 1.1754944e-38, %v807
        %v809 = vsel %vm806, %v808, %v804
        %v810 = vmul.f32 1.0, %v809
        %v811 = vmul.f32 %v810, 2.0
        %v812 = vsub.f32 %v811, 1.0
        %814 = vrot.lane.b32.xlu0 %v812, 96
        %v815 = vpop.permute.xlu0 %814
        %v817 = vmul.f32 %v810, %v815
        %v818 = vtanh.pop %v817
        %820 = vrot.lane.b32.xlu0 %v818, 48
        %v821 = vpop.permute.xlu0 %820
        %v823 = vmul.f32 %v810, %v821
        %v824 = vld [vmem:[%s185] sm:$0xff]
        %826 = vrot.lane.b32.xlu0 %v791, 80
        %v827 = vpop.permute.xlu0 %826
        %830 = vrot.lane.b32.xlu0 %v823, 32
        %v831 = vpop.permute.xlu0 %830
        %834 = vrot.lane.b32.xlu0 %v824, 32
        %v835 = vpop.permute.xlu0 %834
        %v837 = vsel %vm216, %v827, %v831
        %vm838 = vcmask 261120
        %v839 = vsel %vm838, %v837, %v835
        %v840 = vperm.slane %v196, 0
        %vm841 = vcmask 326656
        %v843 = vsel %vm841, %v839, 0
        %845 = vmatpush.msra.mxu0 0.0
        %846 = vmatpush.msra.mxu0 0.0
        %847 = vmatpush.msra.mxu0 0.0
        %848 = vmatpush.msra.mxu0 0.0
        %849 = vmatpush.msra.mxu0 0.0
        %850 = vmatpush.msra.mxu0 0.0
        %851 = vmatpush.msra.mxu0 0.0
        %852 = vmatpush.msra.mxu0 0.0
        %853 = vmatpush.msra.mxu0 0.0
        %854 = vmatpush.msra.mxu0 0.0
        %855 = vmatpush.msra.mxu0 0.0
        %856 = vmatpush.msra.mxu0 %v195
        %857 = vmatpush.msra.mxu0 %v194
        %858 = vmatpush.msra.mxu0 %v193
        %859 = vmatpush.msra.mxu0 %v192
        %860 = vmatpush.msra.mxu0 %v191
        %861 = vmatmul.f32.gmra.mxu0 %v843
        %v862 = vpop.f32.mrf.mxu0
        %v863 = vadd.f32 %v840, %v862
        %864 = vdwg.mxu0
        %v865 = vmax.f32 %v863, 0.0
        %v866 = vperm.slane %v201, 0
        %v868 = vsel %vm838, %v865, 0
        %870 = vmatpush.msra.mxu0 0.0
        %871 = vmatpush.msra.mxu0 0.0
        %872 = vmatpush.msra.mxu0 0.0
        %873 = vmatpush.msra.mxu0 0.0
        %874 = vmatpush.msra.mxu0 0.0
        %875 = vmatpush.msra.mxu0 0.0
        %876 = vmatpush.msra.mxu0 0.0
        %877 = vmatpush.msra.mxu0 0.0
        %878 = vmatpush.msra.mxu0 0.0
        %879 = vmatpush.msra.mxu0 0.0
        %880 = vmatpush.msra.mxu0 0.0
        %881 = vmatpush.msra.mxu0 0.0
        %882 = vmatpush.msra.mxu0 %v200
        %883 = vmatpush.msra.mxu0 %v199
        %884 = vmatpush.msra.mxu0 %v198
        %885 = vmatpush.msra.mxu0 %v197
        %886 = vmatmul.f32.gmra.mxu0 %v868
        %v887 = vpop.f32.mrf.mxu0
        %v888 = vadd.f32 %v866, %v887
        %889 = vdwg.mxu0
        %v890 = vmax.f32 %v888, 0.0
        %v891 = vperm.slane %v206, 0
        %v893 = vsel %vm838, %v890, 0
        %895 = vmatpush.msra.mxu0 0.0
        %896 = vmatpush.msra.mxu0 0.0
        %897 = vmatpush.msra.mxu0 0.0
        %898 = vmatpush.msra.mxu0 0.0
        %899 = vmatpush.msra.mxu0 0.0
        %900 = vmatpush.msra.mxu0 0.0
        %901 = vmatpush.msra.mxu0 0.0
        %902 = vmatpush.msra.mxu0 0.0
        %903 = vmatpush.msra.mxu0 0.0
        %904 = vmatpush.msra.mxu0 0.0
        %905 = vmatpush.msra.mxu0 0.0
        %906 = vmatpush.msra.mxu0 0.0
        %907 = vmatpush.msra.mxu0 %v205
        %908 = vmatpush.msra.mxu0 %v204
        %909 = vmatpush.msra.mxu0 %v203
        %910 = vmatpush.msra.mxu0 %v202
        %911 = vmatmul.f32.gmra.mxu0 %v893
        %v912 = vpop.f32.mrf.mxu0
        %v913 = vadd.f32 %v891, %v912
        %914 = vdwg.mxu0
        %v915 = vtanh.pop %v913
        %vm916 = vcmask 64512
        %v917 = vsel %vm916, %v915, 0.0
        %918 = vst [vmem:[%s176] sm:$0xff] %v917
        %s919 = sand.u32 %s98, 1
        %s920 = scalar_lea.sflag [#allocation3], %s919
        %s921 = sand.u32 %s98, 1
        %s922 = smul.addr %s921, 8
        %s923 = scalar_lea.vmem [#allocation2], %s922
        // Predicated region
        $region33: #{tpu_custom_call.1} parent=31 // pred_check
          %p924 = pneg %p108
        $region34: #{tpu_custom_call.1} parent=31 // pred_check_branch
          %926 = sbr.rel (%p924) target = $region36
        $region35: #{tpu_custom_call.1} parent=31 // pred_region
          %928 = vsyncadd %s920, 0
          %s929 = smul.addr %s17, 8
          %s930 = scalar_lea.hbm %s3, %s929
          %s932 = sshll.u32 %s923, 4
          %s933 = int_to_ptr.vmem [resolvable:$true] %s932
          %s934 = sshll.u32 %s930, 4
          %s935 = int_to_ptr.hbm [resolvable:$true] %s934
          %937 = dma.vmem_to_hbm [thread:$0]  %s933, 128, %s935, %s920
        $region36: #{tpu_custom_call.1} parent=31 // pred_fallthru
          _
      $region32: #{tpu_custom_call.1} parent=5 // pred_fallthru
        _
      %p938 = scmp.le.s32.totalorder 2, %s12
      // Predicated region
      $region37: #{tpu_custom_call.1} parent=5 // pred_check
        %p939 = pneg %p938
      $region38: #{tpu_custom_call.1} parent=5 // pred_check_branch
        %941 = sbr.rel (%p939) target = $region40
      $region39: #{tpu_custom_call.1} parent=5 // pred_region
        %s942 = ssub.s32 %s12, 2
        // Predicated region
        $region41: #{tpu_custom_call.1} parent=39 // pred_check
          %p943 = pneg %p114
        $region42: #{tpu_custom_call.1} parent=39 // pred_check_branch
          %945 = sbr.rel (%p943) target = $region44
        $region43: #{tpu_custom_call.1} parent=39 // pred_region
          %s946 = sand.u32 %s99, 1
          %s947 = scalar_lea.sflag [#allocation3], %s946
          %s948 = sand.u32 %s99, 1
          %s949 = smul.addr %s948, 8
          %s950 = scalar_lea.vmem [#allocation2], %s949
          %952 = dma.done %s947, 128
        $region44: #{tpu_custom_call.1} parent=39 // pred_fallthru
          _
      $region40: #{tpu_custom_call.1} parent=5 // pred_fallthru
        _
    $region6: #{tpu_custom_call.1} parent=1 // loop_footer
      %s16 = sadd.s32 1, %s12
    $region7: #{tpu_custom_call.1} parent=1 // loop_footer_branch
      %11 = sbr.rel target = $region3
    $region8: #{tpu_custom_call.1} parent=1 // loop_exit
      _
    %953 = vsyncpa [#allocation3], 1
    %s954 = scalar_lea.sflag [#allocation3], 1
    %955 = vsyncpa %s954, 1

</llo_original>
